<compile_context>
chip_gen: v7x
topology: tpu7x:2x2x1
jax: 0.10.0
libtpu: 0.0.40
codegen_flags: <defaults>
</compile_context>

<pallas_src>
import math
from functools import partial

import jax
import jax.numpy as jnp
from jax.experimental import pallas as pl
from jax.experimental.pallas import tpu as pltpu

EPS = 1e-3  # BatchNorm1d eps in the reference module


def spin_kernel(x_ref, wcat_ref, pwp_ref, w2_ref, hdp_ref, w3_ref, o_ref):
    x = x_ref[...]                              # (B, in+1); last lane is sex (0/1)
    n_cols = x.shape[1]
    sex = x[:, n_cols - 1:n_cols]               # (B, 1)
    pwp = pwp_ref[...]                          # (4, P): bf, bm, gamma1, beta1
    hdp = hdp_ref[...]                          # (3, H): b2, gamma2, beta2
    P = pwp.shape[1]

    # --- fused sex-specific masked pathway layer: one 2P-lane MXU dot ---
    hcat = jnp.dot(x, wcat_ref[...], preferred_element_type=jnp.float32)   # (B, 2P)
    hf = hcat[:, :P] + pwp[0:1, :]
    hm = hcat[:, P:] + pwp[1:2, :]
    h = jnp.maximum(jnp.where(sex < 0.5, hf, hm), 0.0)                     # ReLU

    # --- bn1: single-pass batch statistics (biased var) ---
    mu1 = jnp.mean(h, axis=0, keepdims=True)
    m2_1 = jnp.mean(h * h, axis=0, keepdims=True)
    var1 = jnp.maximum(m2_1 - mu1 * mu1, 0.0)
    h = (h - mu1) * jax.lax.rsqrt(var1 + EPS) * pwp[2:3, :] + pwp[3:4, :]

    # --- layer2 + ReLU + bn2 ---
    h2 = jnp.dot(h, w2_ref[...], preferred_element_type=jnp.float32) + hdp[0:1, :]
    h2 = jnp.maximum(h2, 0.0)
    mu2 = jnp.mean(h2, axis=0, keepdims=True)
    m2_2 = jnp.mean(h2 * h2, axis=0, keepdims=True)
    var2 = jnp.maximum(m2_2 - mu2 * mu2, 0.0)
    h2 = (h2 - mu2) * jax.lax.rsqrt(var2 + EPS) * hdp[1:2, :] + hdp[2:3, :]

    # --- layer3 (no bias): zero-padded to a lane-dense 128-wide output ---
    o_ref[...] = jnp.dot(h2, w3_ref[...], preferred_element_type=jnp.float32)


def prepare_spin_params(params, pathway_mask):
    """One-time weight prep (masking, transposes, fusion, packing)."""
    wf = (params["Wf"] * pathway_mask).T                       # (in, P)
    wm = (params["Wm"] * pathway_mask).T                       # (in, P)
    wcat = jnp.concatenate([wf, wm], axis=1)                   # (in, 2P)
    # extra zero row so the sex column (last lane of x) contributes nothing
    wcat_aug = jnp.concatenate(
        [wcat, jnp.zeros((1, wcat.shape[1]), jnp.float32)], axis=0)   # (in+1, 2P)

    pwp = jnp.stack([params["bf"], params["bm"], params["g1"], params["be1"]], axis=0)
    hdp = jnp.stack([params["b2"], params["g2"], params["be2"]], axis=0)

    w2 = params["W2"].T                                        # (P, H)
    out_nodes, hidden = params["W3"].shape
    out_pad = ((out_nodes + 127) // 128) * 128
    w3p = jnp.zeros((hidden, out_pad), jnp.float32).at[:, :out_nodes].set(params["W3"].T)

    prep = {"wcat": wcat_aug, "pwp": pwp, "w2": w2, "hdp": hdp, "w3p": w3p}
    return prep, out_nodes


@partial(jax.jit, static_argnames=("out_nodes",))
def spin_forward(x, prep, out_nodes):
    """x: (B, in_Nodes + 1) float32, last column is sex (0=female, 1=male)."""
    B = x.shape[0]
    out_pad = prep["w3p"].shape[1]
    vmem_spec = pl.BlockSpec(memory_space=pltpu.MemorySpace.VMEM)

    out = pl.pallas_call(
        spin_kernel,
        out_shape=jax.ShapeDtypeStruct((B, out_pad), jnp.float32),
        in_specs=[vmem_spec] * 6,
        out_specs=vmem_spec,
    )(x, prep["wcat"], prep["pwp"], prep["w2"], prep["hdp"], prep["w3p"])

    # Mimic torch.cat((x_female, x_male), 0): permute the tiny OUTPUT, not the input.
    # Slice to out_nodes lanes first so the gather moves (B, out_nodes), not (B, 128).
    out_small = out[:, :out_nodes]
    order = jnp.argsort(x[:, -1], stable=True)   # stable => original order within each sex
    return out_small[order]


def reference_forward(x, params, pathway_mask):
    """Plain-JAX reference mirroring the PyTorch forward (training mode, p_drop=0)."""
    feats = x[:, :-1]
    sex = x[:, -1]
    order = jnp.argsort(sex, stable=True)
    feats = feats[order]
    sex_s = sex[order][:, None]

    wf = params["Wf"] * pathway_mask
    wm = params["Wm"] * pathway_mask
    hf = feats @ wf.T + params["bf"]
    hm = feats @ wm.T + params["bm"]
    h = jnp.maximum(jnp.where(sex_s == 0.0, hf, hm), 0.0)
    mu = h.mean(0); var = ((h - mu) ** 2).mean(0)
    h = (h - mu) / jnp.sqrt(var + EPS) * params["g1"] + params["be1"]
    h2 = jnp.maximum(h @ params["W2"].T + params["b2"], 0.0)
    mu2 = h2.mean(0); var2 = ((h2 - mu2) ** 2).mean(0)
    h2 = (h2 - mu2) / jnp.sqrt(var2 + EPS) * params["g2"] + params["be2"]
    return h2 @ params["W3"].T


def make_params(key, in_nodes, pathway_nodes, hidden_nodes, out_nodes):
    ks = jax.random.split(key, 8)

    def he_normal(k, fan_out, fan_in):
        return jax.random.normal(k, (fan_out, fan_in), jnp.float32) * math.sqrt(2.0 / fan_in)

    def bias(k, fan_out, fan_in):
        b = 1.0 / math.sqrt(fan_in)
        return jax.random.uniform(k, (fan_out,), jnp.float32, -b, b)

    return {
        "Wf": he_normal(ks[0], pathway_nodes, in_nodes),
        "bf": bias(ks[1], pathway_nodes, in_nodes),
        "Wm": he_normal(ks[2], pathway_nodes, in_nodes),
        "bm": bias(ks[3], pathway_nodes, in_nodes),
        "W2": he_normal(ks[4], hidden_nodes, pathway_nodes),
        "b2": bias(ks[5], hidden_nodes, pathway_nodes),
        "W3": he_normal(ks[6], out_nodes, hidden_nodes),
        "g1": jnp.ones((pathway_nodes,), jnp.float32),
        "be1": jnp.zeros((pathway_nodes,), jnp.float32),
        "g2": jnp.ones((hidden_nodes,), jnp.float32),
        "be2": jnp.zeros((hidden_nodes,), jnp.float32),
    }


if __name__ == "__main__":
    B, in_nodes, pathway_nodes, hidden_nodes, out_nodes = 8, 32, 64, 32, 1

    key = jax.random.PRNGKey(0)
    k_feat, k_sex, k_mask, k_par = jax.random.split(key, 4)

    feats = jax.random.normal(k_feat, (B, in_nodes), jnp.float32)
    # deterministic sex column with both 0 and 1 present (females/males mixed)
    sex_col = jax.random.permutation(
        k_sex, jnp.array([0, 1] * (B // 2), jnp.float32))
    x = jnp.concatenate([feats, sex_col[:, None]], axis=1)   # (B, in_nodes + 1)

    # pathway connectivity mask (pathway_Nodes, in_Nodes), binary
    pathway_mask = jax.random.bernoulli(
        k_mask, 0.3, (pathway_nodes, in_nodes)).astype(jnp.float32)

    params = make_params(k_par, in_nodes, pathway_nodes, hidden_nodes, out_nodes)
    prep, n_out = prepare_spin_params(params, pathway_mask)

    out = spin_forward(x, prep, n_out)
    out = jax.block_until_ready(out)

    ref = reference_forward(x, params, pathway_mask)
    assert out.shape == (B, out_nodes)
    assert jnp.allclose(out, ref, atol=1e-4, rtol=1e-4), "mismatch vs reference"

    print("KERNEL_OK")
</pallas_src>

<mosaic_0001>
module attributes {stable_mosaic.version = 11 : i64} {
  func.func @spin_kernel(%arg0: memref<8x33xf32, #tpu.memory_space<vmem>>, %arg1: memref<33x128xf32, #tpu.memory_space<vmem>>, %arg2: memref<4x64xf32, #tpu.memory_space<vmem>>, %arg3: memref<64x32xf32, #tpu.memory_space<vmem>>, %arg4: memref<3x32xf32, #tpu.memory_space<vmem>>, %arg5: memref<32x128xf32, #tpu.memory_space<vmem>>, %arg6: memref<8x128xf32, #tpu.memory_space<vmem>>) attributes {dimension_semantics = [], scalar_prefetch = 0 : i64, scratch_operands = 0 : i64, tpu.core_type = #tpu.core_type<tc>} {
    %c0 = arith.constant 0 : index
    %c0_0 = arith.constant 0 : index
    %0 = vector.load %arg0[%c0, %c0_0] : memref<8x33xf32, #tpu.memory_space<vmem>>, vector<8x33xf32>
    %1 = vector.extract_strided_slice %0 {offsets = [0, 32], sizes = [8, 1], strides = [1, 1]} : vector<8x33xf32> to vector<8x1xf32>
    %c0_1 = arith.constant 0 : index
    %c0_2 = arith.constant 0 : index
    %2 = vector.load %arg2[%c0_1, %c0_2] : memref<4x64xf32, #tpu.memory_space<vmem>>, vector<4x64xf32>
    %c0_3 = arith.constant 0 : index
    %c0_4 = arith.constant 0 : index
    %3 = vector.load %arg4[%c0_3, %c0_4] : memref<3x32xf32, #tpu.memory_space<vmem>>, vector<3x32xf32>
    %c0_5 = arith.constant 0 : index
    %c0_6 = arith.constant 0 : index
    %4 = vector.load %arg1[%c0_5, %c0_6] : memref<33x128xf32, #tpu.memory_space<vmem>>, vector<33x128xf32>
    %cst = arith.constant dense<0.000000e+00> : vector<8x128xf32>
    %5 = tpu.matmul %0, %4, %cst {dimension_numbers = #tpu.dot_dimension_numbers<[1], [0], [0], [1], [0, 0, 1, 1], [], []>} : vector<8x33xf32>, vector<33x128xf32>, vector<8x128xf32> -> vector<8x128xf32>
    %6 = vector.extract_strided_slice %5 {offsets = [0, 0], sizes = [8, 64], strides = [1, 1]} : vector<8x128xf32> to vector<8x64xf32>
    %7 = vector.extract_strided_slice %2 {offsets = [0, 0], sizes = [1, 64], strides = [1, 1]} : vector<4x64xf32> to vector<1x64xf32>
    %8 = vector.broadcast %7 : vector<1x64xf32> to vector<8x64xf32>
    %9 = arith.addf %6, %8 : vector<8x64xf32>
    %10 = vector.extract_strided_slice %5 {offsets = [0, 64], sizes = [8, 64], strides = [1, 1]} : vector<8x128xf32> to vector<8x64xf32>
    %11 = vector.extract_strided_slice %2 {offsets = [1, 0], sizes = [1, 64], strides = [1, 1]} : vector<4x64xf32> to vector<1x64xf32>
    %12 = vector.broadcast %11 : vector<1x64xf32> to vector<8x64xf32>
    %13 = arith.addf %10, %12 : vector<8x64xf32>
    %cst_7 = arith.constant 5.000000e-01 : f32
    %14 = vector.broadcast %cst_7 : f32 to vector<8x1xf32>
    %15 = arith.cmpf olt, %1, %14 : vector<8x1xf32>
    %16 = vector.shape_cast %15 : vector<8x1xi1> to vector<8x1xi1>
    %17 = vector.broadcast %16 : vector<8x1xi1> to vector<8x64xi1>
    %18 = arith.select %17, %9, %13 : vector<8x64xi1>, vector<8x64xf32>
    %cst_8 = arith.constant 0.000000e+00 : f32
    %19 = vector.broadcast %cst_8 : f32 to vector<8x64xf32>
    %20 = arith.maximumf %18, %19 : vector<8x64xf32>
    %cst_9 = arith.constant dense<0.000000e+00> : vector<64xf32>
    %21 = vector.multi_reduction <add>, %20, %cst_9 [0] : vector<8x64xf32> to vector<64xf32>
    %22 = vector.shape_cast %21 : vector<64xf32> to vector<1x64xf32>
    %cst_10 = arith.constant 8.000000e+00 : f32
    %23 = vector.broadcast %cst_10 : f32 to vector<1x64xf32>
    %24 = arith.divf %22, %23 : vector<1x64xf32>
    %25 = arith.mulf %20, %20 : vector<8x64xf32>
    %cst_11 = arith.constant dense<0.000000e+00> : vector<64xf32>
    %26 = vector.multi_reduction <add>, %25, %cst_11 [0] : vector<8x64xf32> to vector<64xf32>
    %27 = vector.shape_cast %26 : vector<64xf32> to vector<1x64xf32>
    %cst_12 = arith.constant 8.000000e+00 : f32
    %28 = vector.broadcast %cst_12 : f32 to vector<1x64xf32>
    %29 = arith.divf %27, %28 : vector<1x64xf32>
    %30 = arith.mulf %24, %24 : vector<1x64xf32>
    %31 = arith.subf %29, %30 : vector<1x64xf32>
    %cst_13 = arith.constant 0.000000e+00 : f32
    %32 = vector.broadcast %cst_13 : f32 to vector<1x64xf32>
    %33 = arith.maximumf %31, %32 : vector<1x64xf32>
    %34 = vector.broadcast %24 : vector<1x64xf32> to vector<8x64xf32>
    %35 = arith.subf %20, %34 : vector<8x64xf32>
    %cst_14 = arith.constant 1.000000e-03 : f32
    %36 = vector.broadcast %cst_14 : f32 to vector<1x64xf32>
    %37 = arith.addf %33, %36 : vector<1x64xf32>
    %38 = math.rsqrt %37 : vector<1x64xf32>
    %39 = vector.broadcast %38 : vector<1x64xf32> to vector<8x64xf32>
    %40 = arith.mulf %35, %39 : vector<8x64xf32>
    %41 = vector.extract_strided_slice %2 {offsets = [2, 0], sizes = [1, 64], strides = [1, 1]} : vector<4x64xf32> to vector<1x64xf32>
    %42 = vector.broadcast %41 : vector<1x64xf32> to vector<8x64xf32>
    %43 = arith.mulf %40, %42 : vector<8x64xf32>
    %44 = vector.extract_strided_slice %2 {offsets = [3, 0], sizes = [1, 64], strides = [1, 1]} : vector<4x64xf32> to vector<1x64xf32>
    %45 = vector.broadcast %44 : vector<1x64xf32> to vector<8x64xf32>
    %46 = arith.addf %43, %45 : vector<8x64xf32>
    %c0_15 = arith.constant 0 : index
    %c0_16 = arith.constant 0 : index
    %47 = vector.load %arg3[%c0_15, %c0_16] : memref<64x32xf32, #tpu.memory_space<vmem>>, vector<64x32xf32>
    %cst_17 = arith.constant dense<0.000000e+00> : vector<8x32xf32>
    %48 = tpu.matmul %46, %47, %cst_17 {dimension_numbers = #tpu.dot_dimension_numbers<[1], [0], [0], [1], [0, 0, 1, 1], [], []>} : vector<8x64xf32>, vector<64x32xf32>, vector<8x32xf32> -> vector<8x32xf32>
    %49 = vector.extract_strided_slice %3 {offsets = [0, 0], sizes = [1, 32], strides = [1, 1]} : vector<3x32xf32> to vector<1x32xf32>
    %50 = vector.broadcast %49 : vector<1x32xf32> to vector<8x32xf32>
    %51 = arith.addf %48, %50 : vector<8x32xf32>
    %cst_18 = arith.constant 0.000000e+00 : f32
    %52 = vector.broadcast %cst_18 : f32 to vector<8x32xf32>
    %53 = arith.maximumf %51, %52 : vector<8x32xf32>
    %cst_19 = arith.constant dense<0.000000e+00> : vector<32xf32>
    %54 = vector.multi_reduction <add>, %53, %cst_19 [0] : vector<8x32xf32> to vector<32xf32>
    %55 = vector.shape_cast %54 : vector<32xf32> to vector<1x32xf32>
    %cst_20 = arith.constant 8.000000e+00 : f32
    %56 = vector.broadcast %cst_20 : f32 to vector<1x32xf32>
    %57 = arith.divf %55, %56 : vector<1x32xf32>
    %58 = arith.mulf %53, %53 : vector<8x32xf32>
    %cst_21 = arith.constant dense<0.000000e+00> : vector<32xf32>
    %59 = vector.multi_reduction <add>, %58, %cst_21 [0] : vector<8x32xf32> to vector<32xf32>
    %60 = vector.shape_cast %59 : vector<32xf32> to vector<1x32xf32>
    %cst_22 = arith.constant 8.000000e+00 : f32
    %61 = vector.broadcast %cst_22 : f32 to vector<1x32xf32>
    %62 = arith.divf %60, %61 : vector<1x32xf32>
    %63 = arith.mulf %57, %57 : vector<1x32xf32>
    %64 = arith.subf %62, %63 : vector<1x32xf32>
    %cst_23 = arith.constant 0.000000e+00 : f32
    %65 = vector.broadcast %cst_23 : f32 to vector<1x32xf32>
    %66 = arith.maximumf %64, %65 : vector<1x32xf32>
    %67 = vector.broadcast %57 : vector<1x32xf32> to vector<8x32xf32>
    %68 = arith.subf %53, %67 : vector<8x32xf32>
    %cst_24 = arith.constant 1.000000e-03 : f32
    %69 = vector.broadcast %cst_24 : f32 to vector<1x32xf32>
    %70 = arith.addf %66, %69 : vector<1x32xf32>
    %71 = math.rsqrt %70 : vector<1x32xf32>
    %72 = vector.broadcast %71 : vector<1x32xf32> to vector<8x32xf32>
    %73 = arith.mulf %68, %72 : vector<8x32xf32>
    %74 = vector.extract_strided_slice %3 {offsets = [1, 0], sizes = [1, 32], strides = [1, 1]} : vector<3x32xf32> to vector<1x32xf32>
    %75 = vector.broadcast %74 : vector<1x32xf32> to vector<8x32xf32>
    %76 = arith.mulf %73, %75 : vector<8x32xf32>
    %77 = vector.extract_strided_slice %3 {offsets = [2, 0], sizes = [1, 32], strides = [1, 1]} : vector<3x32xf32> to vector<1x32xf32>
    %78 = vector.broadcast %77 : vector<1x32xf32> to vector<8x32xf32>
    %79 = arith.addf %76, %78 : vector<8x32xf32>
    %c0_25 = arith.constant 0 : index
    %c0_26 = arith.constant 0 : index
    %80 = vector.load %arg5[%c0_25, %c0_26] : memref<32x128xf32, #tpu.memory_space<vmem>>, vector<32x128xf32>
    %cst_27 = arith.constant dense<0.000000e+00> : vector<8x128xf32>
    %81 = tpu.matmul %79, %80, %cst_27 {dimension_numbers = #tpu.dot_dimension_numbers<[1], [0], [0], [1], [0, 0, 1, 1], [], []>} : vector<8x32xf32>, vector<32x128xf32>, vector<8x128xf32> -> vector<8x128xf32>
    %c0_28 = arith.constant 0 : index
    %c0_29 = arith.constant 0 : index
    %82 = vector.load %arg6[%c0_28, %c0_29] : memref<8x128xf32, #tpu.memory_space<vmem>>, vector<8x128xf32>
    tpu.vector_store %arg6[%c0_28, %c0_29], %81 {strides = array<i32>} : memref<8x128xf32, #tpu.memory_space<vmem>>, vector<8x128xf32>,
    return
  }
}

</mosaic_0001>

<llo_original>
// kernel: spin_forward.1
$region0: #{spin_forward.1}
  #allocation0 [shape = 'u32[]', space=smem, size = 0x4, offset = 0x4, fixed_abs, tag = 'smem constant byte address 0x4 - core index']
  #allocation1 [shape = 'u32[144,128]{1,0:T(1,128)}', space=vmem, size = 0x12000, scoped, tag = 'internal scratch']
  %s0 = inlined_call_operand.vmem [shape: f32[8,33], index: 0, kind: input, shape index: {}]
  %s1 = inlined_call_operand.vmem [shape: f32[33,128], index: 1, kind: input, shape index: {}]
  %s2 = inlined_call_operand.vmem [shape: f32[4,64], index: 2, kind: input, shape index: {}]
  %s3 = inlined_call_operand.vmem [shape: f32[64,32], index: 3, kind: input, shape index: {}]
  %s4 = inlined_call_operand.vmem [shape: f32[3,32], index: 4, kind: input, shape index: {}]
  %s5 = inlined_call_operand.vmem [shape: f32[32,128], index: 5, kind: input, shape index: {}]
  %s6 = inlined_call_operand.vmem [shape: f32[8,128], index: 6, kind: output, shape index: {}]
  %s7 = sld [smem:[#allocation0]]
  $region34: #{spin_forward.1} parent=0
    _
  %s9 = ssub.s32 1, %s7
  %s10 = scalar_select 0, %s9, %s7
  // Predicated region
  $region2: #{spin_forward.1} parent=0 // pred_check
    _
  $region3: #{spin_forward.1} parent=0 // pred_check_branch
    %12 = sbr.rel (0) target = $region5
  $region4: #{spin_forward.1} parent=0 // pred_region
    _
  $region5: #{spin_forward.1} parent=0 // pred_fallthru
    _
  // Predicated region
  $region6: #{spin_forward.1} parent=0 // pred_check
    _
  $region7: #{spin_forward.1} parent=0 // pred_check_branch
    %14 = sbr.rel (0) target = $region9
  $region8: #{spin_forward.1} parent=0 // pred_region
    _
  $region9: #{spin_forward.1} parent=0 // pred_fallthru
    _
  // Predicated region
  $region10: #{spin_forward.1} parent=0 // pred_check
    _
  $region11: #{spin_forward.1} parent=0 // pred_check_branch
    %16 = sbr.rel (0) target = $region13
  $region12: #{spin_forward.1} parent=0 // pred_region
    _
  $region13: #{spin_forward.1} parent=0 // pred_fallthru
    _
  // Predicated region
  $region14: #{spin_forward.1} parent=0 // pred_check
    _
  $region15: #{spin_forward.1} parent=0 // pred_check_branch
    %18 = sbr.rel (0) target = $region17
  $region16: #{spin_forward.1} parent=0 // pred_region
    _
  $region17: #{spin_forward.1} parent=0 // pred_fallthru
    _
  // Predicated region
  $region18: #{spin_forward.1} parent=0 // pred_check
    _
  $region19: #{spin_forward.1} parent=0 // pred_check_branch
    %20 = sbr.rel (0) target = $region21
  $region20: #{spin_forward.1} parent=0 // pred_region
    _
  $region21: #{spin_forward.1} parent=0 // pred_fallthru
    _
  // Predicated region
  $region22: #{spin_forward.1} parent=0 // pred_check
    _
  $region23: #{spin_forward.1} parent=0 // pred_check_branch
    %22 = sbr.rel (0) target = $region25
  $region24: #{spin_forward.1} parent=0 // pred_region
    _
  $region25: #{spin_forward.1} parent=0 // pred_fallthru
    _
  %v23 = vld [vmem:[%s0] sm:$0xff]
  %v24 = vld [vmem:[%s2] sm:$0xf]
  %v25 = vld [vmem:[%s4] sm:$0x7]
  %v26 = vld [vmem:[%s1] sm:$0xff]
  %v27 = vld [vmem:[%s1 + $0x8] sm:$0xff]
  %v28 = vld [vmem:[%s1 + $0x10] sm:$0xff]
  %v29 = vld [vmem:[%s1 + $0x18] sm:$0xff]
  %v30 = vld [vmem:[%s1 + $0x20] sm:$0x1]
  %vm31 = vcmask 269312
  %v33 = vsel %vm31, %v23, 0
  %vm35 = vcmask 1040384
  %v37 = vsel %vm35, %v30, 0
  %39 = vmatprep.subr.mxu0 0.0
  %40 = vmatpush1.msra.mxu0 %v26
  %41 = vmatprep.subr.mxu0 0.0
  %42 = vmatpush1.msra.mxu0 %v27
  %43 = vmatprep.subr.mxu0 0.0
  %44 = vmatpush1.msra.mxu0 %v28
  %45 = vmatprep.subr.mxu0 0.0
  %46 = vmatpush1.msra.mxu0 %v29
  %47 = vmatprep.subr.mxu0 0.0
  %48 = vmatpush1.msra.mxu0 %v37
  %49 = vmatprep.subr.mxu0 0.0
  %50 = vmatpush1.msra.mxu0 0.0
  %51 = vmatprep.subr.mxu0 0.0
  %52 = vmatpush1.msra.mxu0 0.0
  %53 = vmatprep.subr.mxu0 0.0
  %54 = vmatpush1.msra.mxu0 0.0
  %55 = vmatprep.subr.mxu0 0.0
  %56 = vmatpush1.msra.mxu0 0.0
  %57 = vmatprep.subr.mxu0 0.0
  %58 = vmatpush1.msra.mxu0 0.0
  %59 = vmatprep.subr.mxu0 0.0
  %60 = vmatpush1.msra.mxu0 0.0
  %61 = vmatprep.subr.mxu0 0.0
  %62 = vmatpush1.msra.mxu0 0.0
  %63 = vmatprep.subr.mxu0 0.0
  %64 = vmatpush1.msra.mxu0 0.0
  %65 = vmatprep.subr.mxu0 0.0
  %66 = vmatpush1.msra.mxu0 0.0
  %67 = vmatprep.subr.mxu0 0.0
  %68 = vmatpush1.msra.mxu0 0.0
  %69 = vmatprep.subr.mxu0 0.0
  %70 = vmatpush1.msra.mxu0 0.0
  %71 = vmatprep.subr.mxu0 0.0
  %72 = vmatpush1.msra.mxu0 0.0
  %73 = vmatprep.subr.mxu0 0.0
  %74 = vmatpush1.msra.mxu0 0.0
  %75 = vmatprep.subr.mxu0 0.0
  %76 = vmatpush1.msra.mxu0 0.0
  %77 = vmatprep.subr.mxu0 0.0
  %78 = vmatpush1.msra.mxu0 0.0
  %79 = vmatprep.subr.mxu0 0.0
  %80 = vmatpush1.msra.mxu0 0.0
  %81 = vmatprep.subr.mxu0 0.0
  %82 = vmatpush1.msra.mxu0 0.0
  %83 = vmatprep.subr.mxu0 0.0
  %84 = vmatpush1.msra.mxu0 0.0
  %85 = vmatprep.subr.mxu0 0.0
  %86 = vmatpush1.msra.mxu0 0.0
  %87 = vmatprep.subr.mxu0 0.0
  %88 = vmatpush1.msra.mxu0 0.0
  %89 = vmatprep.subr.mxu0 0.0
  %90 = vmatpush1.msra.mxu0 0.0
  %91 = vmatprep.subr.mxu0 0.0
  %92 = vmatpush1.msra.mxu0 0.0
  %93 = vmatprep.subr.mxu0 0.0
  %94 = vmatpush1.msra.mxu0 0.0
  %95 = vmatprep.subr.mxu0 0.0
  %96 = vmatpush1.msra.mxu0 0.0
  %97 = vmatprep.subr.mxu0 0.0
  %98 = vmatpush1.msra.mxu0 0.0
  %99 = vmatprep.subr.mxu0 0.0
  %100 = vmatpush1.msra.mxu0 0.0
  %101 = vmatprep.subr.mxu0 0.0
  %102 = vmatpush1.msra.mxu0 0.0
  %103 = vmatprep.mubr.f32.mxu0 0.0
  %104 = vmatmul.mubr.f32.gmra.mrb[0].mxu0 %v33
  %v105 = vpop.f32.mrb[0].mxu0
  %v106 = vadd.f32 0.0, %v105
  %v107 = vpop.f32.mrb[0].mxu0
  %108 = vdwg.mxu0
  %v109 = vlaneseq
  %v110 = vshrl.u32 %v109, 7
  %v111 = vsub.s32 0, %v110
  %v112 = vrot.slane %v24, %v111
  %v113 = vadd.f32 %v106, %v112
  %v114 = vlaneseq
  %v115 = vshrl.u32 %v114, 7
  %v116 = vsub.s32 1, %v115
  %v117 = vrot.slane %v24, %v116
  %119 = vrot.lane.b32.xlu0 %v117, 64
  %v120 = vpop.permute.xlu0 %119
  %v122 = vadd.f32 %v106, %v120
  %vm123 = vcmp.lt.f32.partialorder %v23, 0.5
  %v124 = vsel %vm123, 1, 0
  %125 = vset.pattern.permute.xlu0 32
  %126 = vperm.xlu0 %125, %v124
  %v127 = vpop.permute.xlu0 %126
  %vm128 = vcmp.eq.s32.totalorder %v127, 1
  %130 = vrot.lane.b32.xlu0 %v122, 64
  %v131 = vpop.permute.xlu0 %130
  %v133 = vsel %vm128, %v113, %v131
  %v134 = vmax.f32 %v133, 0.0
  %vm135 = vcmask 523264
  %v136 = vsel %vm135, %v134, 0.0
  %v137 = vrot.slane %v136, 4
  %v138 = vadd.f32 %v136, %v137
  %v139 = vrot.slane %v138, 2
  %v140 = vadd.f32 %v138, %v139
  %v141 = vrot.slane %v140, 1
  %v142 = vadd.f32 %v140, %v141
  %v143 = vrcp.pop 8.0
  %v144 = vmul.f32 %v142, %v143
  %v145 = vmul.f32 %v134, %v134
  %v146 = vsel %vm135, %v145, 0.0
  %v147 = vrot.slane %v146, 4
  %v148 = vadd.f32 %v146, %v147
  %v149 = vrot.slane %v148, 2
  %v150 = vadd.f32 %v148, %v149
  %v151 = vrot.slane %v150, 1
  %v152 = vadd.f32 %v150, %v151
  %v153 = vmul.f32 %v152, %v143
  %v154 = vmul.f32 %v144, %v144
  %v155 = vsub.f32 %v153, %v154
  %v156 = vmax.f32 %v155, 0.0
  %v157 = vsub.f32 %v134, %v144
  %v158 = vadd.f32 %v156, 0.001
  %v159 = vrsqrt.pop %v158
  %v160 = vmul.f32 %v157, %v159
  %v161 = vlaneseq
  %v162 = vshrl.u32 %v161, 7
  %v163 = vsub.s32 2, %v162
  %v164 = vrot.slane %v24, %v163
  %v165 = vmul.f32 %v160, %v164
  %v166 = vlaneseq
  %v167 = vshrl.u32 %v166, 7
  %v168 = vsub.s32 3, %v167
  %v169 = vrot.slane %v24, %v168
  %v170 = vadd.f32 %v165, %v169
  %v171 = vld [vmem:[%s3] sm:$0xff]
  %v172 = vld [vmem:[%s3 + $0x8] sm:$0xff]
  %v173 = vld [vmem:[%s3 + $0x10] sm:$0xff]
  %v174 = vld [vmem:[%s3 + $0x18] sm:$0xff]
  %v175 = vld [vmem:[%s3 + $0x20] sm:$0xff]
  %v176 = vld [vmem:[%s3 + $0x28] sm:$0xff]
  %v177 = vld [vmem:[%s3 + $0x30] sm:$0xff]
  %v178 = vld [vmem:[%s3 + $0x38] sm:$0xff]
  %v179 = vlaneseq
  %v180 = vshrl.u32 %v179, 7
  %v181 = vsub.s32 0, %v180
  %v182 = vrot.slane %v25, %v181
  %v184 = vsel %vm135, %v170, 0
  %186 = vmatprep.subr.mxu0 0.0
  %187 = vmatpush1.msra.mxu0 %v171
  %188 = vmatprep.subr.mxu0 0.0
  %189 = vmatpush1.msra.mxu0 %v172
  %190 = vmatprep.subr.mxu0 0.0
  %191 = vmatpush1.msra.mxu0 %v173
  %192 = vmatprep.subr.mxu0 0.0
  %193 = vmatpush1.msra.mxu0 %v174
  %194 = vmatprep.subr.mxu0 0.0
  %195 = vmatpush1.msra.mxu0 %v175
  %196 = vmatprep.subr.mxu0 0.0
  %197 = vmatpush1.msra.mxu0 %v176
  %198 = vmatprep.subr.mxu0 0.0
  %199 = vmatpush1.msra.mxu0 %v177
  %200 = vmatprep.subr.mxu0 0.0
  %201 = vmatpush1.msra.mxu0 %v178
  %202 = vmatprep.subr.mxu0 0.0
  %203 = vmatpush1.msra.mxu0 0.0
  %204 = vmatprep.subr.mxu0 0.0
  %205 = vmatpush1.msra.mxu0 0.0
  %206 = vmatprep.subr.mxu0 0.0
  %207 = vmatpush1.msra.mxu0 0.0
  %208 = vmatprep.subr.mxu0 0.0
  %209 = vmatpush1.msra.mxu0 0.0
  %210 = vmatprep.subr.mxu0 0.0
  %211 = vmatpush1.msra.mxu0 0.0
  %212 = vmatprep.subr.mxu0 0.0
  %213 = vmatpush1.msra.mxu0 0.0
  %214 = vmatprep.subr.mxu0 0.0
  %215 = vmatpush1.msra.mxu0 0.0
  %216 = vmatprep.subr.mxu0 0.0
  %217 = vmatpush1.msra.mxu0 0.0
  %218 = vmatprep.subr.mxu0 0.0
  %219 = vmatpush1.msra.mxu0 0.0
  %220 = vmatprep.subr.mxu0 0.0
  %221 = vmatpush1.msra.mxu0 0.0
  %222 = vmatprep.subr.mxu0 0.0
  %223 = vmatpush1.msra.mxu0 0.0
  %224 = vmatprep.subr.mxu0 0.0
  %225 = vmatpush1.msra.mxu0 0.0
  %226 = vmatprep.subr.mxu0 0.0
  %227 = vmatpush1.msra.mxu0 0.0
  %228 = vmatprep.subr.mxu0 0.0
  %229 = vmatpush1.msra.mxu0 0.0
  %230 = vmatprep.subr.mxu0 0.0
  %231 = vmatpush1.msra.mxu0 0.0
  %232 = vmatprep.subr.mxu0 0.0
  %233 = vmatpush1.msra.mxu0 0.0
  %234 = vmatprep.subr.mxu0 0.0
  %235 = vmatpush1.msra.mxu0 0.0
  %236 = vmatprep.subr.mxu0 0.0
  %237 = vmatpush1.msra.mxu0 0.0
  %238 = vmatprep.subr.mxu0 0.0
  %239 = vmatpush1.msra.mxu0 0.0
  %240 = vmatprep.subr.mxu0 0.0
  %241 = vmatpush1.msra.mxu0 0.0
  %242 = vmatprep.subr.mxu0 0.0
  %243 = vmatpush1.msra.mxu0 0.0
  %244 = vmatprep.subr.mxu0 0.0
  %245 = vmatpush1.msra.mxu0 0.0
  %246 = vmatprep.subr.mxu0 0.0
  %247 = vmatpush1.msra.mxu0 0.0
  %248 = vmatprep.subr.mxu0 0.0
  %249 = vmatpush1.msra.mxu0 0.0
  %250 = vmatprep.mubr.f32.mxu0 0.0
  %251 = vmatmul.mubr.f32.gmra.mrb[0].mxu0 %v184
  %v252 = vpop.f32.mrb[0].mxu0
  %v253 = vadd.f32 %v182, %v252
  %v254 = vpop.f32.mrb[0].mxu0
  %255 = vdwg.mxu0
  %v256 = vmax.f32 %v253, 0.0
  %vm257 = vcmask 261120
  %v258 = vsel %vm257, %v256, 0.0
  %v259 = vrot.slane %v258, 4
  %v260 = vadd.f32 %v258, %v259
  %v261 = vrot.slane %v260, 2
  %v262 = vadd.f32 %v260, %v261
  %v263 = vrot.slane %v262, 1
  %v264 = vadd.f32 %v262, %v263
  %v265 = vmul.f32 %v264, %v143
  %v266 = vmul.f32 %v256, %v256
  %v267 = vsel %vm257, %v266, 0.0
  %v268 = vrot.slane %v267, 4
  %v269 = vadd.f32 %v267, %v268
  %v270 = vrot.slane %v269, 2
  %v271 = vadd.f32 %v269, %v270
  %v272 = vrot.slane %v271, 1
  %v273 = vadd.f32 %v271, %v272
  %v274 = vmul.f32 %v273, %v143
  %v275 = vmul.f32 %v265, %v265
  %v276 = vsub.f32 %v274, %v275
  %v277 = vmax.f32 %v276, 0.0
  %v278 = vsub.f32 %v256, %v265
  %v279 = vadd.f32 %v277, 0.001
  %v280 = vrsqrt.pop %v279
  %v281 = vmul.f32 %v278, %v280
  %v282 = vlaneseq
  %v283 = vshrl.u32 %v282, 7
  %v284 = vsub.s32 1, %v283
  %v285 = vrot.slane %v25, %v284
  %v286 = vmul.f32 %v281, %v285
  %v287 = vlaneseq
  %v288 = vshrl.u32 %v287, 7
  %v289 = vsub.s32 2, %v288
  %v290 = vrot.slane %v25, %v289
  %v291 = vadd.f32 %v286, %v290
  %v292 = vld [vmem:[%s5] sm:$0xff]
  %v293 = vld [vmem:[%s5 + $0x8] sm:$0xff]
  %v294 = vld [vmem:[%s5 + $0x10] sm:$0xff]
  %v295 = vld [vmem:[%s5 + $0x18] sm:$0xff]
  %v297 = vsel %vm257, %v291, 0
  %299 = vmatprep.subr.mxu0 0.0
  %300 = vmatpush1.msra.mxu0 %v292
  %301 = vmatprep.subr.mxu0 0.0
  %302 = vmatpush1.msra.mxu0 %v293
  %303 = vmatprep.subr.mxu0 0.0
  %304 = vmatpush1.msra.mxu0 %v294
  %305 = vmatprep.subr.mxu0 0.0
  %306 = vmatpush1.msra.mxu0 %v295
  %307 = vmatprep.subr.mxu0 0.0
  %308 = vmatpush1.msra.mxu0 0.0
  %309 = vmatprep.subr.mxu0 0.0
  %310 = vmatpush1.msra.mxu0 0.0
  %311 = vmatprep.subr.mxu0 0.0
  %312 = vmatpush1.msra.mxu0 0.0
  %313 = vmatprep.subr.mxu0 0.0
  %314 = vmatpush1.msra.mxu0 0.0
  %315 = vmatprep.subr.mxu0 0.0
  %316 = vmatpush1.msra.mxu0 0.0
  %317 = vmatprep.subr.mxu0 0.0
  %318 = vmatpush1.msra.mxu0 0.0
  %319 = vmatprep.subr.mxu0 0.0
  %320 = vmatpush1.msra.mxu0 0.0
  %321 = vmatprep.subr.mxu0 0.0
  %322 = vmatpush1.msra.mxu0 0.0
  %323 = vmatprep.subr.mxu0 0.0
  %324 = vmatpush1.msra.mxu0 0.0
  %325 = vmatprep.subr.mxu0 0.0
  %326 = vmatpush1.msra.mxu0 0.0
  %327 = vmatprep.subr.mxu0 0.0
  %328 = vmatpush1.msra.mxu0 0.0
  %329 = vmatprep.subr.mxu0 0.0
  %330 = vmatpush1.msra.mxu0 0.0
  %331 = vmatprep.subr.mxu0 0.0
  %332 = vmatpush1.msra.mxu0 0.0
  %333 = vmatprep.subr.mxu0 0.0
  %334 = vmatpush1.msra.mxu0 0.0
  %335 = vmatprep.subr.mxu0 0.0
  %336 = vmatpush1.msra.mxu0 0.0
  %337 = vmatprep.subr.mxu0 0.0
  %338 = vmatpush1.msra.mxu0 0.0
  %339 = vmatprep.subr.mxu0 0.0
  %340 = vmatpush1.msra.mxu0 0.0
  %341 = vmatprep.subr.mxu0 0.0
  %342 = vmatpush1.msra.mxu0 0.0
  %343 = vmatprep.subr.mxu0 0.0
  %344 = vmatpush1.msra.mxu0 0.0
  %345 = vmatprep.subr.mxu0 0.0
  %346 = vmatpush1.msra.mxu0 0.0
  %347 = vmatprep.subr.mxu0 0.0
  %348 = vmatpush1.msra.mxu0 0.0
  %349 = vmatprep.subr.mxu0 0.0
  %350 = vmatpush1.msra.mxu0 0.0
  %351 = vmatprep.subr.mxu0 0.0
  %352 = vmatpush1.msra.mxu0 0.0
  %353 = vmatprep.subr.mxu0 0.0
  %354 = vmatpush1.msra.mxu0 0.0
  %355 = vmatprep.subr.mxu0 0.0
  %356 = vmatpush1.msra.mxu0 0.0
  %357 = vmatprep.subr.mxu0 0.0
  %358 = vmatpush1.msra.mxu0 0.0
  %359 = vmatprep.subr.mxu0 0.0
  %360 = vmatpush1.msra.mxu0 0.0
  %361 = vmatprep.subr.mxu0 0.0
  %362 = vmatpush1.msra.mxu0 0.0
  %363 = vmatprep.mubr.f32.mxu0 0.0
  %364 = vmatmul.mubr.f32.gmra.mrb[0].mxu0 %v297
  %v365 = vpop.f32.mrb[0].mxu0
  %v366 = vadd.f32 0.0, %v365
  %v367 = vpop.f32.mrb[0].mxu0
  %368 = vdwg.mxu0
  %369 = vst [vmem:[%s6] sm:$0xff] %v366
  // Predicated region
  $region26: #{spin_forward.1} parent=0 // pred_check
    _
  $region27: #{spin_forward.1} parent=0 // pred_check_branch
    %371 = sbr.rel (0) target = $region29
  $region28: #{spin_forward.1} parent=0 // pred_region
    _
  $region29: #{spin_forward.1} parent=0 // pred_fallthru
    _
  // Predicated region
  $region30: #{spin_forward.1} parent=0 // pred_check
    _
  $region31: #{spin_forward.1} parent=0 // pred_check_branch
    %373 = sbr.rel (0) target = $region33
  $region32: #{spin_forward.1} parent=0 // pred_region
    _
  $region33: #{spin_forward.1} parent=0 // pred_fallthru
    _

</llo_original>
